<compile_context>
chip_gen: v5e
topology: v5e:2x2
jax: 0.10.0
libtpu: 0.0.40
codegen_flags: <defaults>
</compile_context>

<pallas_src>
import jax
import jax.numpy as jnp
import numpy as np
from jax import lax
from jax.experimental import pallas as pl
from jax.experimental.pallas import tpu as pltpu

# ---- packed parameter slab layout (flat f32, PyTorch (out, in) weights) ----
_W1_OFF = 0      # w1: (10, 3)  -> 30
_B1_OFF = 30     # b1: (10,)    -> 10
_W2_OFF = 40     # w2: (5, 10)  -> 50
_B2_OFF = 90     # b2: (5,)     ->  5
_W3_OFF = 95     # w3: (1, 5)   ->  5
_B3_OFF = 100    # b3: (1,)     ->  1
_P_LEN = 101

_LANE = 128          # batch elements per lane row
_S_INNER = 8         # sublane rows per compute sub-chunk (one f32 vreg per slab)
_TILE_N_MAX = 512    # max sublane rows per grid step: (3,512,128) f32 = 768 KiB of x


def _round_up(v, m):
    return ((v + m - 1) // m) * m


def _mlp_kernel(p_ref, x_ref, o_ref):
    """p_ref: (101,) f32 in SMEM.  x_ref: (3, TILE_N, 128) VMEM.  o_ref: (TILE_N, 128)."""
    # ---- hoist all 101 SMEM scalar reads above the chunk loop (read once) ----
    w1 = [[p_ref[_W1_OFF + 3 * j + i] for i in range(3)] for j in range(10)]
    b1 = [p_ref[_B1_OFF + j] for j in range(10)]
    w2 = [[p_ref[_W2_OFF + 10 * j + k] for k in range(10)] for j in range(5)]
    b2 = [p_ref[_B2_OFF + j] for j in range(5)]
    w3 = [p_ref[_W3_OFF + k] for k in range(5)]
    b3 = p_ref[_B3_OFF]

    tile_n = o_ref.shape[0]                 # static block shape
    n_chunks = tile_n // _S_INNER           # static trip count

    def chunk(c, carry):
        r = pl.multiple_of(c * _S_INNER, _S_INNER)
        # Dense (8, 128) slabs: full vreg per operand, batch on lanes+sublanes.
        x0 = x_ref[0, pl.ds(r, _S_INNER), :]
        x1 = x_ref[1, pl.ds(r, _S_INNER), :]
        x2 = x_ref[2, pl.ds(r, _S_INNER), :]

        # ---- layer 1: Linear(3 -> 10) + ReLU (VPU broadcast-FMA chains) ----
        h1 = []
        for j in range(10):
            a = w1[j][0] * x0 + w1[j][1] * x1 + w1[j][2] * x2 + b1[j]
            h1.append(jnp.maximum(a, 0.0))

        # ---- layer 2: Linear(10 -> 5) + ReLU ----
        h2 = []
        for j in range(5):
            a = w2[j][0] * h1[0]
            for k in range(1, 10):
                a = a + w2[j][k] * h1[k]
            a = a + b2[j]
            h2.append(jnp.maximum(a, 0.0))

        # ---- layer 3: Linear(5 -> 1) + Sigmoid ----
        z = w3[0] * h2[0]
        for k in range(1, 5):
            z = z + w3[k] * h2[k]
        z = z + b3

        # sigmoid(z) == 0.5 * tanh(0.5*z) + 0.5  (EUP tanh, overflow-safe)
        o_ref[pl.ds(r, _S_INNER), :] = 0.5 * jnp.tanh(0.5 * z) + 0.5
        return carry

    unroll = max(1, min(4, n_chunks))
    lax.fori_loop(0, n_chunks, chunk, 0, unroll=unroll)


def pack_params(params):
    """Flatten all weights/biases into one (101,) f32 slab for SMEM."""
    return jnp.concatenate([
        params["w1"].reshape(-1), params["b1"].reshape(-1),
        params["w2"].reshape(-1), params["b2"].reshape(-1),
        params["w3"].reshape(-1), params["b3"].reshape(-1),
    ]).astype(jnp.float32)


def _forward_from_feature_major(x_t, b_valid, p_flat):
    """x_t: (3, B_fm) float32 feature-major input (B_fm >= b_valid). Returns (b_valid, 1)."""
    b_fm = x_t.shape[1]
    n = pl.cdiv(b_fm, _LANE)             # 128-lane rows needed
    n_pad = _round_up(n, _S_INNER)       # sublane-align so every slab is (8,128)
    b_pad = n_pad * _LANE
    if b_pad != b_fm:
        x_t = jnp.pad(x_t, ((0, 0), (0, b_pad - b_fm)))
    x_t = x_t.reshape(3, n_pad, _LANE)

    tile_n = min(_TILE_N_MAX, n_pad)
    # v7x: if the grid would be a single step, split it so both TensorCores run.
    if tile_n == n_pad and n_pad >= 2 * _S_INNER:
        tile_n = _round_up(pl.cdiv(n_pad, 2), _S_INNER)
    grid = (pl.cdiv(n_pad, tile_n),)

    out = pl.pallas_call(
        _mlp_kernel,
        out_shape=jax.ShapeDtypeStruct((n_pad, _LANE), jnp.float32),
        grid=grid,
        in_specs=[
            pl.BlockSpec(memory_space=pltpu.MemorySpace.SMEM),          # packed params
            pl.BlockSpec((3, tile_n, _LANE), lambda i: (0, i, 0)),      # x block (VMEM)
        ],
        out_specs=pl.BlockSpec((tile_n, _LANE), lambda i: (i, 0)),      # lane-dense out
        compiler_params=pltpu.CompilerParams(
            dimension_semantics=("parallel",),
        ),
    )(p_flat, x_t)

    return out.reshape(b_pad, 1)[:b_valid]


def simple_surfer_ai_forward_feature_major(x_fm, params):
    """x_fm: (3, B) float32 (feature-major, skips the wrapper transpose)."""
    return _forward_from_feature_major(x_fm.astype(jnp.float32), x_fm.shape[1],
                                       pack_params(params))


def simple_surfer_ai_forward(x, params):
    """x: (B, 3) float32; params dict in PyTorch (out, in) convention. Returns (B, 1)."""
    B = x.shape[0]
    # One transpose copy is unavoidable for the batch-major interface; feed
    # feature-major data upstream (simple_surfer_ai_forward_feature_major) to skip it.
    x_t = jnp.transpose(x.astype(jnp.float32))           # (3, B)
    return _forward_from_feature_major(x_t, B, pack_params(params))


def init_params(key):
    """Deterministic init mirroring nn.Linear's U(-1/sqrt(fan_in), +1/sqrt(fan_in))."""
    def linear(key, fan_in, fan_out):
        kw, kb = jax.random.split(key)
        bound = 1.0 / float(np.sqrt(fan_in))
        w = jax.random.uniform(kw, (fan_out, fan_in), jnp.float32, -bound, bound)
        b = jax.random.uniform(kb, (fan_out,), jnp.float32, -bound, bound)
        return w, b

    k1, k2, k3 = jax.random.split(key, 3)
    w1, b1 = linear(k1, 3, 10)
    w2, b2 = linear(k2, 10, 5)
    w3, b3 = linear(k3, 5, 1)
    return {"w1": w1, "b1": b1, "w2": w2, "b2": b2, "w3": w3, "b3": b3}


def _reference(x, p):
    hi = jax.lax.Precision.HIGHEST
    h1 = jnp.maximum(jnp.dot(x, p["w1"].T, precision=hi) + p["b1"], 0.0)
    h2 = jnp.maximum(jnp.dot(h1, p["w2"].T, precision=hi) + p["b2"], 0.0)
    return jax.nn.sigmoid(jnp.dot(h2, p["w3"].T, precision=hi) + p["b3"])


if __name__ == "__main__":
    key = jax.random.PRNGKey(0)
    kx1, kx2, kx3, kp = jax.random.split(key, 4)
    params = init_params(kp)

    # Small batch: single (8,128) slab, padded from 8.
    x_small = jax.random.normal(kx1, (8, 3), jnp.float32)
    out_small = simple_surfer_ai_forward(x_small, params)
    jax.block_until_ready(out_small)
    assert out_small.shape == (8, 1)
    assert jnp.allclose(out_small, _reference(x_small, params), atol=1e-5, rtol=1e-5)

    # Non-multiple-of-128 batch: exercises lane/sublane padding + slicing.
    x_odd = jax.random.normal(kx2, (300, 3), jnp.float32)
    out_odd = simple_surfer_ai_forward(x_odd, params)
    jax.block_until_ready(out_odd)
    assert out_odd.shape == (300, 1)
    assert jnp.allclose(out_odd, _reference(x_odd, params), atol=1e-5, rtol=1e-5)

    # Medium batch: exercises the 2-step parallel grid and the inner chunk loop.
    x_med = jax.random.normal(kx3, (4096, 3), jnp.float32)
    out_med = simple_surfer_ai_forward(x_med, params)
    jax.block_until_ready(out_med)
    assert out_med.shape == (4096, 1)
    assert jnp.allclose(out_med, _reference(x_med, params), atol=1e-5, rtol=1e-5)

    print("KERNEL_OK")
</pallas_src>

<mosaic_0001>
module attributes {stable_mosaic.version = 11 : i64} {
  func.func @_mlp_kernel(%arg0: i32, %arg1: memref<101xf32, #tpu.memory_space<smem>>, %arg2: memref<3x8x128xf32, #tpu.memory_space<vmem>>, %arg3: memref<8x128xf32, #tpu.memory_space<vmem>>) attributes {dimension_semantics = [#tpu.dimension_semantics<parallel>], iteration_bounds = array<i64: 1>, scalar_prefetch = 0 : i64, scratch_operands = 0 : i64, tpu.core_type = #tpu.core_type<tc>, window_params = [{transform_indices = @transform_0, window_bounds = array<i64: 101>}, {transform_indices = @transform_1, window_bounds = array<i64: 3, 8, 128>}, {transform_indices = @transform_2, window_bounds = array<i64: 8, 128>}]} {
    %c0 = arith.constant 0 : index
    %0 = memref.load %arg1[%c0] : memref<101xf32, #tpu.memory_space<smem>>
    %c1 = arith.constant 1 : index
    %1 = memref.load %arg1[%c1] : memref<101xf32, #tpu.memory_space<smem>>
    %c2 = arith.constant 2 : index
    %2 = memref.load %arg1[%c2] : memref<101xf32, #tpu.memory_space<smem>>
    %c3 = arith.constant 3 : index
    %3 = memref.load %arg1[%c3] : memref<101xf32, #tpu.memory_space<smem>>
    %c4 = arith.constant 4 : index
    %4 = memref.load %arg1[%c4] : memref<101xf32, #tpu.memory_space<smem>>
    %c5 = arith.constant 5 : index
    %5 = memref.load %arg1[%c5] : memref<101xf32, #tpu.memory_space<smem>>
    %c6 = arith.constant 6 : index
    %6 = memref.load %arg1[%c6] : memref<101xf32, #tpu.memory_space<smem>>
    %c7 = arith.constant 7 : index
    %7 = memref.load %arg1[%c7] : memref<101xf32, #tpu.memory_space<smem>>
    %c8 = arith.constant 8 : index
    %8 = memref.load %arg1[%c8] : memref<101xf32, #tpu.memory_space<smem>>
    %c9 = arith.constant 9 : index
    %9 = memref.load %arg1[%c9] : memref<101xf32, #tpu.memory_space<smem>>
    %c10 = arith.constant 10 : index
    %10 = memref.load %arg1[%c10] : memref<101xf32, #tpu.memory_space<smem>>
    %c11 = arith.constant 11 : index
    %11 = memref.load %arg1[%c11] : memref<101xf32, #tpu.memory_space<smem>>
    %c12 = arith.constant 12 : index
    %12 = memref.load %arg1[%c12] : memref<101xf32, #tpu.memory_space<smem>>
    %c13 = arith.constant 13 : index
    %13 = memref.load %arg1[%c13] : memref<101xf32, #tpu.memory_space<smem>>
    %c14 = arith.constant 14 : index
    %14 = memref.load %arg1[%c14] : memref<101xf32, #tpu.memory_space<smem>>
    %c15 = arith.constant 15 : index
    %15 = memref.load %arg1[%c15] : memref<101xf32, #tpu.memory_space<smem>>
    %c16 = arith.constant 16 : index
    %16 = memref.load %arg1[%c16] : memref<101xf32, #tpu.memory_space<smem>>
    %c17 = arith.constant 17 : index
    %17 = memref.load %arg1[%c17] : memref<101xf32, #tpu.memory_space<smem>>
    %c18 = arith.constant 18 : index
    %18 = memref.load %arg1[%c18] : memref<101xf32, #tpu.memory_space<smem>>
    %c19 = arith.constant 19 : index
    %19 = memref.load %arg1[%c19] : memref<101xf32, #tpu.memory_space<smem>>
    %c20 = arith.constant 20 : index
    %20 = memref.load %arg1[%c20] : memref<101xf32, #tpu.memory_space<smem>>
    %c21 = arith.constant 21 : index
    %21 = memref.load %arg1[%c21] : memref<101xf32, #tpu.memory_space<smem>>
    %c22 = arith.constant 22 : index
    %22 = memref.load %arg1[%c22] : memref<101xf32, #tpu.memory_space<smem>>
    %c23 = arith.constant 23 : index
    %23 = memref.load %arg1[%c23] : memref<101xf32, #tpu.memory_space<smem>>
    %c24 = arith.constant 24 : index
    %24 = memref.load %arg1[%c24] : memref<101xf32, #tpu.memory_space<smem>>
    %c25 = arith.constant 25 : index
    %25 = memref.load %arg1[%c25] : memref<101xf32, #tpu.memory_space<smem>>
    %c26 = arith.constant 26 : index
    %26 = memref.load %arg1[%c26] : memref<101xf32, #tpu.memory_space<smem>>
    %c27 = arith.constant 27 : index
    %27 = memref.load %arg1[%c27] : memref<101xf32, #tpu.memory_space<smem>>
    %c28 = arith.constant 28 : index
    %28 = memref.load %arg1[%c28] : memref<101xf32, #tpu.memory_space<smem>>
    %c29 = arith.constant 29 : index
    %29 = memref.load %arg1[%c29] : memref<101xf32, #tpu.memory_space<smem>>
    %c30 = arith.constant 30 : index
    %30 = memref.load %arg1[%c30] : memref<101xf32, #tpu.memory_space<smem>>
    %c31 = arith.constant 31 : index
    %31 = memref.load %arg1[%c31] : memref<101xf32, #tpu.memory_space<smem>>
    %c32 = arith.constant 32 : index
    %32 = memref.load %arg1[%c32] : memref<101xf32, #tpu.memory_space<smem>>
    %c33 = arith.constant 33 : index
    %33 = memref.load %arg1[%c33] : memref<101xf32, #tpu.memory_space<smem>>
    %c34 = arith.constant 34 : index
    %34 = memref.load %arg1[%c34] : memref<101xf32, #tpu.memory_space<smem>>
    %c35 = arith.constant 35 : index
    %35 = memref.load %arg1[%c35] : memref<101xf32, #tpu.memory_space<smem>>
    %c36 = arith.constant 36 : index
    %36 = memref.load %arg1[%c36] : memref<101xf32, #tpu.memory_space<smem>>
    %c37 = arith.constant 37 : index
    %37 = memref.load %arg1[%c37] : memref<101xf32, #tpu.memory_space<smem>>
    %c38 = arith.constant 38 : index
    %38 = memref.load %arg1[%c38] : memref<101xf32, #tpu.memory_space<smem>>
    %c39 = arith.constant 39 : index
    %39 = memref.load %arg1[%c39] : memref<101xf32, #tpu.memory_space<smem>>
    %c40 = arith.constant 40 : index
    %40 = memref.load %arg1[%c40] : memref<101xf32, #tpu.memory_space<smem>>
    %c41 = arith.constant 41 : index
    %41 = memref.load %arg1[%c41] : memref<101xf32, #tpu.memory_space<smem>>
    %c42 = arith.constant 42 : index
    %42 = memref.load %arg1[%c42] : memref<101xf32, #tpu.memory_space<smem>>
    %c43 = arith.constant 43 : index
    %43 = memref.load %arg1[%c43] : memref<101xf32, #tpu.memory_space<smem>>
    %c44 = arith.constant 44 : index
    %44 = memref.load %arg1[%c44] : memref<101xf32, #tpu.memory_space<smem>>
    %c45 = arith.constant 45 : index
    %45 = memref.load %arg1[%c45] : memref<101xf32, #tpu.memory_space<smem>>
    %c46 = arith.constant 46 : index
    %46 = memref.load %arg1[%c46] : memref<101xf32, #tpu.memory_space<smem>>
    %c47 = arith.constant 47 : index
    %47 = memref.load %arg1[%c47] : memref<101xf32, #tpu.memory_space<smem>>
    %c48 = arith.constant 48 : index
    %48 = memref.load %arg1[%c48] : memref<101xf32, #tpu.memory_space<smem>>
    %c49 = arith.constant 49 : index
    %49 = memref.load %arg1[%c49] : memref<101xf32, #tpu.memory_space<smem>>
    %c50 = arith.constant 50 : index
    %50 = memref.load %arg1[%c50] : memref<101xf32, #tpu.memory_space<smem>>
    %c51 = arith.constant 51 : index
    %51 = memref.load %arg1[%c51] : memref<101xf32, #tpu.memory_space<smem>>
    %c52 = arith.constant 52 : index
    %52 = memref.load %arg1[%c52] : memref<101xf32, #tpu.memory_space<smem>>
    %c53 = arith.constant 53 : index
    %53 = memref.load %arg1[%c53] : memref<101xf32, #tpu.memory_space<smem>>
    %c54 = arith.constant 54 : index
    %54 = memref.load %arg1[%c54] : memref<101xf32, #tpu.memory_space<smem>>
    %c55 = arith.constant 55 : index
    %55 = memref.load %arg1[%c55] : memref<101xf32, #tpu.memory_space<smem>>
    %c56 = arith.constant 56 : index
    %56 = memref.load %arg1[%c56] : memref<101xf32, #tpu.memory_space<smem>>
    %c57 = arith.constant 57 : index
    %57 = memref.load %arg1[%c57] : memref<101xf32, #tpu.memory_space<smem>>
    %c58 = arith.constant 58 : index
    %58 = memref.load %arg1[%c58] : memref<101xf32, #tpu.memory_space<smem>>
    %c59 = arith.constant 59 : index
    %59 = memref.load %arg1[%c59] : memref<101xf32, #tpu.memory_space<smem>>
    %c60 = arith.constant 60 : index
    %60 = memref.load %arg1[%c60] : memref<101xf32, #tpu.memory_space<smem>>
    %c61 = arith.constant 61 : index
    %61 = memref.load %arg1[%c61] : memref<101xf32, #tpu.memory_space<smem>>
    %c62 = arith.constant 62 : index
    %62 = memref.load %arg1[%c62] : memref<101xf32, #tpu.memory_space<smem>>
    %c63 = arith.constant 63 : index
    %63 = memref.load %arg1[%c63] : memref<101xf32, #tpu.memory_space<smem>>
    %c64 = arith.constant 64 : index
    %64 = memref.load %arg1[%c64] : memref<101xf32, #tpu.memory_space<smem>>
    %c65 = arith.constant 65 : index
    %65 = memref.load %arg1[%c65] : memref<101xf32, #tpu.memory_space<smem>>
    %c66 = arith.constant 66 : index
    %66 = memref.load %arg1[%c66] : memref<101xf32, #tpu.memory_space<smem>>
    %c67 = arith.constant 67 : index
    %67 = memref.load %arg1[%c67] : memref<101xf32, #tpu.memory_space<smem>>
    %c68 = arith.constant 68 : index
    %68 = memref.load %arg1[%c68] : memref<101xf32, #tpu.memory_space<smem>>
    %c69 = arith.constant 69 : index
    %69 = memref.load %arg1[%c69] : memref<101xf32, #tpu.memory_space<smem>>
    %c70 = arith.constant 70 : index
    %70 = memref.load %arg1[%c70] : memref<101xf32, #tpu.memory_space<smem>>
    %c71 = arith.constant 71 : index
    %71 = memref.load %arg1[%c71] : memref<101xf32, #tpu.memory_space<smem>>
    %c72 = arith.constant 72 : index
    %72 = memref.load %arg1[%c72] : memref<101xf32, #tpu.memory_space<smem>>
    %c73 = arith.constant 73 : index
    %73 = memref.load %arg1[%c73] : memref<101xf32, #tpu.memory_space<smem>>
    %c74 = arith.constant 74 : index
    %74 = memref.load %arg1[%c74] : memref<101xf32, #tpu.memory_space<smem>>
    %c75 = arith.constant 75 : index
    %75 = memref.load %arg1[%c75] : memref<101xf32, #tpu.memory_space<smem>>
    %c76 = arith.constant 76 : index
    %76 = memref.load %arg1[%c76] : memref<101xf32, #tpu.memory_space<smem>>
    %c77 = arith.constant 77 : index
    %77 = memref.load %arg1[%c77] : memref<101xf32, #tpu.memory_space<smem>>
    %c78 = arith.constant 78 : index
    %78 = memref.load %arg1[%c78] : memref<101xf32, #tpu.memory_space<smem>>
    %c79 = arith.constant 79 : index
    %79 = memref.load %arg1[%c79] : memref<101xf32, #tpu.memory_space<smem>>
    %c80 = arith.constant 80 : index
    %80 = memref.load %arg1[%c80] : memref<101xf32, #tpu.memory_space<smem>>
    %c81 = arith.constant 81 : index
    %81 = memref.load %arg1[%c81] : memref<101xf32, #tpu.memory_space<smem>>
    %c82 = arith.constant 82 : index
    %82 = memref.load %arg1[%c82] : memref<101xf32, #tpu.memory_space<smem>>
    %c83 = arith.constant 83 : index
    %83 = memref.load %arg1[%c83] : memref<101xf32, #tpu.memory_space<smem>>
    %c84 = arith.constant 84 : index
    %84 = memref.load %arg1[%c84] : memref<101xf32, #tpu.memory_space<smem>>
    %c85 = arith.constant 85 : index
    %85 = memref.load %arg1[%c85] : memref<101xf32, #tpu.memory_space<smem>>
    %c86 = arith.constant 86 : index
    %86 = memref.load %arg1[%c86] : memref<101xf32, #tpu.memory_space<smem>>
    %c87 = arith.constant 87 : index
    %87 = memref.load %arg1[%c87] : memref<101xf32, #tpu.memory_space<smem>>
    %c88 = arith.constant 88 : index
    %88 = memref.load %arg1[%c88] : memref<101xf32, #tpu.memory_space<smem>>
    %c89 = arith.constant 89 : index
    %89 = memref.load %arg1[%c89] : memref<101xf32, #tpu.memory_space<smem>>
    %c90 = arith.constant 90 : index
    %90 = memref.load %arg1[%c90] : memref<101xf32, #tpu.memory_space<smem>>
    %c91 = arith.constant 91 : index
    %91 = memref.load %arg1[%c91] : memref<101xf32, #tpu.memory_space<smem>>
    %c92 = arith.constant 92 : index
    %92 = memref.load %arg1[%c92] : memref<101xf32, #tpu.memory_space<smem>>
    %c93 = arith.constant 93 : index
    %93 = memref.load %arg1[%c93] : memref<101xf32, #tpu.memory_space<smem>>
    %c94 = arith.constant 94 : index
    %94 = memref.load %arg1[%c94] : memref<101xf32, #tpu.memory_space<smem>>
    %c95 = arith.constant 95 : index
    %95 = memref.load %arg1[%c95] : memref<101xf32, #tpu.memory_space<smem>>
    %c96 = arith.constant 96 : index
    %96 = memref.load %arg1[%c96] : memref<101xf32, #tpu.memory_space<smem>>
    %c97 = arith.constant 97 : index
    %97 = memref.load %arg1[%c97] : memref<101xf32, #tpu.memory_space<smem>>
    %c98 = arith.constant 98 : index
    %98 = memref.load %arg1[%c98] : memref<101xf32, #tpu.memory_space<smem>>
    %c99 = arith.constant 99 : index
    %99 = memref.load %arg1[%c99] : memref<101xf32, #tpu.memory_space<smem>>
    %c100 = arith.constant 100 : index
    %100 = memref.load %arg1[%c100] : memref<101xf32, #tpu.memory_space<smem>>
    %c0_i32 = arith.constant 0 : i32
    %c8_i32 = arith.constant 8 : i32
    %101 = arith.muli %c0_i32, %c8_i32 : i32
    %102 = tpu.assume_multiple %101, 8 : i32
    %c0_0 = arith.constant 0 : index
    %103 = arith.index_cast %102 : i32 to index
    %c0_1 = arith.constant 0 : index
    %104 = vector.load %arg2[%c0_0, %103, %c0_1] : memref<3x8x128xf32, #tpu.memory_space<vmem>>, vector<1x8x128xf32>
    %105 = vector.shape_cast %104 : vector<1x8x128xf32> to vector<8x128xf32>
    %c1_2 = arith.constant 1 : index
    %106 = arith.index_cast %102 : i32 to index
    %c0_3 = arith.constant 0 : index
    %107 = vector.load %arg2[%c1_2, %106, %c0_3] : memref<3x8x128xf32, #tpu.memory_space<vmem>>, vector<1x8x128xf32>
    %108 = vector.shape_cast %107 : vector<1x8x128xf32> to vector<8x128xf32>
    %c2_4 = arith.constant 2 : index
    %109 = arith.index_cast %102 : i32 to index
    %c0_5 = arith.constant 0 : index
    %110 = vector.load %arg2[%c2_4, %109, %c0_5] : memref<3x8x128xf32, #tpu.memory_space<vmem>>, vector<1x8x128xf32>
    %111 = vector.shape_cast %110 : vector<1x8x128xf32> to vector<8x128xf32>
    %112 = vector.broadcast %0 : f32 to vector<8x128xf32>
    %113 = arith.mulf %112, %105 : vector<8x128xf32>
    %114 = vector.broadcast %1 : f32 to vector<8x128xf32>
    %115 = arith.mulf %114, %108 : vector<8x128xf32>
    %116 = arith.addf %113, %115 : vector<8x128xf32>
    %117 = vector.broadcast %2 : f32 to vector<8x128xf32>
    %118 = arith.mulf %117, %111 : vector<8x128xf32>
    %119 = arith.addf %116, %118 : vector<8x128xf32>
    %120 = vector.broadcast %30 : f32 to vector<8x128xf32>
    %121 = arith.addf %119, %120 : vector<8x128xf32>
    %cst = arith.constant 0.000000e+00 : f32
    %122 = vector.broadcast %cst : f32 to vector<8x128xf32>
    %123 = arith.maximumf %121, %122 : vector<8x128xf32>
    %124 = vector.broadcast %3 : f32 to vector<8x128xf32>
    %125 = arith.mulf %124, %105 : vector<8x128xf32>
    %126 = vector.broadcast %4 : f32 to vector<8x128xf32>
    %127 = arith.mulf %126, %108 : vector<8x128xf32>
    %128 = arith.addf %125, %127 : vector<8x128xf32>
    %129 = vector.broadcast %5 : f32 to vector<8x128xf32>
    %130 = arith.mulf %129, %111 : vector<8x128xf32>
    %131 = arith.addf %128, %130 : vector<8x128xf32>
    %132 = vector.broadcast %31 : f32 to vector<8x128xf32>
    %133 = arith.addf %131, %132 : vector<8x128xf32>
    %cst_6 = arith.constant 0.000000e+00 : f32
    %134 = vector.broadcast %cst_6 : f32 to vector<8x128xf32>
    %135 = arith.maximumf %133, %134 : vector<8x128xf32>
    %136 = vector.broadcast %6 : f32 to vector<8x128xf32>
    %137 = arith.mulf %136, %105 : vector<8x128xf32>
    %138 = vector.broadcast %7 : f32 to vector<8x128xf32>
    %139 = arith.mulf %138, %108 : vector<8x128xf32>
    %140 = arith.addf %137, %139 : vector<8x128xf32>
    %141 = vector.broadcast %8 : f32 to vector<8x128xf32>
    %142 = arith.mulf %141, %111 : vector<8x128xf32>
    %143 = arith.addf %140, %142 : vector<8x128xf32>
    %144 = vector.broadcast %32 : f32 to vector<8x128xf32>
    %145 = arith.addf %143, %144 : vector<8x128xf32>
    %cst_7 = arith.constant 0.000000e+00 : f32
    %146 = vector.broadcast %cst_7 : f32 to vector<8x128xf32>
    %147 = arith.maximumf %145, %146 : vector<8x128xf32>
    %148 = vector.broadcast %9 : f32 to vector<8x128xf32>
    %149 = arith.mulf %148, %105 : vector<8x128xf32>
    %150 = vector.broadcast %10 : f32 to vector<8x128xf32>
    %151 = arith.mulf %150, %108 : vector<8x128xf32>
    %152 = arith.addf %149, %151 : vector<8x128xf32>
    %153 = vector.broadcast %11 : f32 to vector<8x128xf32>
    %154 = arith.mulf %153, %111 : vector<8x128xf32>
    %155 = arith.addf %152, %154 : vector<8x128xf32>
    %156 = vector.broadcast %33 : f32 to vector<8x128xf32>
    %157 = arith.addf %155, %156 : vector<8x128xf32>
    %cst_8 = arith.constant 0.000000e+00 : f32
    %158 = vector.broadcast %cst_8 : f32 to vector<8x128xf32>
    %159 = arith.maximumf %157, %158 : vector<8x128xf32>
    %160 = vector.broadcast %12 : f32 to vector<8x128xf32>
    %161 = arith.mulf %160, %105 : vector<8x128xf32>
    %162 = vector.broadcast %13 : f32 to vector<8x128xf32>
    %163 = arith.mulf %162, %108 : vector<8x128xf32>
    %164 = arith.addf %161, %163 : vector<8x128xf32>
    %165 = vector.broadcast %14 : f32 to vector<8x128xf32>
    %166 = arith.mulf %165, %111 : vector<8x128xf32>
    %167 = arith.addf %164, %166 : vector<8x128xf32>
    %168 = vector.broadcast %34 : f32 to vector<8x128xf32>
    %169 = arith.addf %167, %168 : vector<8x128xf32>
    %cst_9 = arith.constant 0.000000e+00 : f32
    %170 = vector.broadcast %cst_9 : f32 to vector<8x128xf32>
    %171 = arith.maximumf %169, %170 : vector<8x128xf32>
    %172 = vector.broadcast %15 : f32 to vector<8x128xf32>
    %173 = arith.mulf %172, %105 : vector<8x128xf32>
    %174 = vector.broadcast %16 : f32 to vector<8x128xf32>
    %175 = arith.mulf %174, %108 : vector<8x128xf32>
    %176 = arith.addf %173, %175 : vector<8x128xf32>
    %177 = vector.broadcast %17 : f32 to vector<8x128xf32>
    %178 = arith.mulf %177, %111 : vector<8x128xf32>
    %179 = arith.addf %176, %178 : vector<8x128xf32>
    %180 = vector.broadcast %35 : f32 to vector<8x128xf32>
    %181 = arith.addf %179, %180 : vector<8x128xf32>
    %cst_10 = arith.constant 0.000000e+00 : f32
    %182 = vector.broadcast %cst_10 : f32 to vector<8x128xf32>
    %183 = arith.maximumf %181, %182 : vector<8x128xf32>
    %184 = vector.broadcast %18 : f32 to vector<8x128xf32>
    %185 = arith.mulf %184, %105 : vector<8x128xf32>
    %186 = vector.broadcast %19 : f32 to vector<8x128xf32>
    %187 = arith.mulf %186, %108 : vector<8x128xf32>
    %188 = arith.addf %185, %187 : vector<8x128xf32>
    %189 = vector.broadcast %20 : f32 to vector<8x128xf32>
    %190 = arith.mulf %189, %111 : vector<8x128xf32>
    %191 = arith.addf %188, %190 : vector<8x128xf32>
    %192 = vector.broadcast %36 : f32 to vector<8x128xf32>
    %193 = arith.addf %191, %192 : vector<8x128xf32>
    %cst_11 = arith.constant 0.000000e+00 : f32
    %194 = vector.broadcast %cst_11 : f32 to vector<8x128xf32>
    %195 = arith.maximumf %193, %194 : vector<8x128xf32>
    %196 = vector.broadcast %21 : f32 to vector<8x128xf32>
    %197 = arith.mulf %196, %105 : vector<8x128xf32>
    %198 = vector.broadcast %22 : f32 to vector<8x128xf32>
    %199 = arith.mulf %198, %108 : vector<8x128xf32>
    %200 = arith.addf %197, %199 : vector<8x128xf32>
    %201 = vector.broadcast %23 : f32 to vector<8x128xf32>
    %202 = arith.mulf %201, %111 : vector<8x128xf32>
    %203 = arith.addf %200, %202 : vector<8x128xf32>
    %204 = vector.broadcast %37 : f32 to vector<8x128xf32>
    %205 = arith.addf %203, %204 : vector<8x128xf32>
    %cst_12 = arith.constant 0.000000e+00 : f32
    %206 = vector.broadcast %cst_12 : f32 to vector<8x128xf32>
    %207 = arith.maximumf %205, %206 : vector<8x128xf32>
    %208 = vector.broadcast %24 : f32 to vector<8x128xf32>
    %209 = arith.mulf %208, %105 : vector<8x128xf32>
    %210 = vector.broadcast %25 : f32 to vector<8x128xf32>
    %211 = arith.mulf %210, %108 : vector<8x128xf32>
    %212 = arith.addf %209, %211 : vector<8x128xf32>
    %213 = vector.broadcast %26 : f32 to vector<8x128xf32>
    %214 = arith.mulf %213, %111 : vector<8x128xf32>
    %215 = arith.addf %212, %214 : vector<8x128xf32>
    %216 = vector.broadcast %38 : f32 to vector<8x128xf32>
    %217 = arith.addf %215, %216 : vector<8x128xf32>
    %cst_13 = arith.constant 0.000000e+00 : f32
    %218 = vector.broadcast %cst_13 : f32 to vector<8x128xf32>
    %219 = arith.maximumf %217, %218 : vector<8x128xf32>
    %220 = vector.broadcast %27 : f32 to vector<8x128xf32>
    %221 = arith.mulf %220, %105 : vector<8x128xf32>
    %222 = vector.broadcast %28 : f32 to vector<8x128xf32>
    %223 = arith.mulf %222, %108 : vector<8x128xf32>
    %224 = arith.addf %221, %223 : vector<8x128xf32>
    %225 = vector.broadcast %29 : f32 to vector<8x128xf32>
    %226 = arith.mulf %225, %111 : vector<8x128xf32>
    %227 = arith.addf %224, %226 : vector<8x128xf32>
    %228 = vector.broadcast %39 : f32 to vector<8x128xf32>
    %229 = arith.addf %227, %228 : vector<8x128xf32>
    %cst_14 = arith.constant 0.000000e+00 : f32
    %230 = vector.broadcast %cst_14 : f32 to vector<8x128xf32>
    %231 = arith.maximumf %229, %230 : vector<8x128xf32>
    %232 = vector.broadcast %40 : f32 to vector<8x128xf32>
    %233 = arith.mulf %232, %123 : vector<8x128xf32>
    %234 = vector.broadcast %41 : f32 to vector<8x128xf32>
    %235 = arith.mulf %234, %135 : vector<8x128xf32>
    %236 = arith.addf %233, %235 : vector<8x128xf32>
    %237 = vector.broadcast %42 : f32 to vector<8x128xf32>
    %238 = arith.mulf %237, %147 : vector<8x128xf32>
    %239 = arith.addf %236, %238 : vector<8x128xf32>
    %240 = vector.broadcast %43 : f32 to vector<8x128xf32>
    %241 = arith.mulf %240, %159 : vector<8x128xf32>
    %242 = arith.addf %239, %241 : vector<8x128xf32>
    %243 = vector.broadcast %44 : f32 to vector<8x128xf32>
    %244 = arith.mulf %243, %171 : vector<8x128xf32>
    %245 = arith.addf %242, %244 : vector<8x128xf32>
    %246 = vector.broadcast %45 : f32 to vector<8x128xf32>
    %247 = arith.mulf %246, %183 : vector<8x128xf32>
    %248 = arith.addf %245, %247 : vector<8x128xf32>
    %249 = vector.broadcast %46 : f32 to vector<8x128xf32>
    %250 = arith.mulf %249, %195 : vector<8x128xf32>
    %251 = arith.addf %248, %250 : vector<8x128xf32>
    %252 = vector.broadcast %47 : f32 to vector<8x128xf32>
    %253 = arith.mulf %252, %207 : vector<8x128xf32>
    %254 = arith.addf %251, %253 : vector<8x128xf32>
    %255 = vector.broadcast %48 : f32 to vector<8x128xf32>
    %256 = arith.mulf %255, %219 : vector<8x128xf32>
    %257 = arith.addf %254, %256 : vector<8x128xf32>
    %258 = vector.broadcast %49 : f32 to vector<8x128xf32>
    %259 = arith.mulf %258, %231 : vector<8x128xf32>
    %260 = arith.addf %257, %259 : vector<8x128xf32>
    %261 = vector.broadcast %90 : f32 to vector<8x128xf32>
    %262 = arith.addf %260, %261 : vector<8x128xf32>
    %cst_15 = arith.constant 0.000000e+00 : f32
    %263 = vector.broadcast %cst_15 : f32 to vector<8x128xf32>
    %264 = arith.maximumf %262, %263 : vector<8x128xf32>
    %265 = vector.broadcast %50 : f32 to vector<8x128xf32>
    %266 = arith.mulf %265, %123 : vector<8x128xf32>
    %267 = vector.broadcast %51 : f32 to vector<8x128xf32>
    %268 = arith.mulf %267, %135 : vector<8x128xf32>
    %269 = arith.addf %266, %268 : vector<8x128xf32>
    %270 = vector.broadcast %52 : f32 to vector<8x128xf32>
    %271 = arith.mulf %270, %147 : vector<8x128xf32>
    %272 = arith.addf %269, %271 : vector<8x128xf32>
    %273 = vector.broadcast %53 : f32 to vector<8x128xf32>
    %274 = arith.mulf %273, %159 : vector<8x128xf32>
    %275 = arith.addf %272, %274 : vector<8x128xf32>
    %276 = vector.broadcast %54 : f32 to vector<8x128xf32>
    %277 = arith.mulf %276, %171 : vector<8x128xf32>
    %278 = arith.addf %275, %277 : vector<8x128xf32>
    %279 = vector.broadcast %55 : f32 to vector<8x128xf32>
    %280 = arith.mulf %279, %183 : vector<8x128xf32>
    %281 = arith.addf %278, %280 : vector<8x128xf32>
    %282 = vector.broadcast %56 : f32 to vector<8x128xf32>
    %283 = arith.mulf %282, %195 : vector<8x128xf32>
    %284 = arith.addf %281, %283 : vector<8x128xf32>
    %285 = vector.broadcast %57 : f32 to vector<8x128xf32>
    %286 = arith.mulf %285, %207 : vector<8x128xf32>
    %287 = arith.addf %284, %286 : vector<8x128xf32>
    %288 = vector.broadcast %58 : f32 to vector<8x128xf32>
    %289 = arith.mulf %288, %219 : vector<8x128xf32>
    %290 = arith.addf %287, %289 : vector<8x128xf32>
    %291 = vector.broadcast %59 : f32 to vector<8x128xf32>
    %292 = arith.mulf %291, %231 : vector<8x128xf32>
    %293 = arith.addf %290, %292 : vector<8x128xf32>
    %294 = vector.broadcast %91 : f32 to vector<8x128xf32>
    %295 = arith.addf %293, %294 : vector<8x128xf32>
    %cst_16 = arith.constant 0.000000e+00 : f32
    %296 = vector.broadcast %cst_16 : f32 to vector<8x128xf32>
    %297 = arith.maximumf %295, %296 : vector<8x128xf32>
    %298 = vector.broadcast %60 : f32 to vector<8x128xf32>
    %299 = arith.mulf %298, %123 : vector<8x128xf32>
    %300 = vector.broadcast %61 : f32 to vector<8x128xf32>
    %301 = arith.mulf %300, %135 : vector<8x128xf32>
    %302 = arith.addf %299, %301 : vector<8x128xf32>
    %303 = vector.broadcast %62 : f32 to vector<8x128xf32>
    %304 = arith.mulf %303, %147 : vector<8x128xf32>
    %305 = arith.addf %302, %304 : vector<8x128xf32>
    %306 = vector.broadcast %63 : f32 to vector<8x128xf32>
    %307 = arith.mulf %306, %159 : vector<8x128xf32>
    %308 = arith.addf %305, %307 : vector<8x128xf32>
    %309 = vector.broadcast %64 : f32 to vector<8x128xf32>
    %310 = arith.mulf %309, %171 : vector<8x128xf32>
    %311 = arith.addf %308, %310 : vector<8x128xf32>
    %312 = vector.broadcast %65 : f32 to vector<8x128xf32>
    %313 = arith.mulf %312, %183 : vector<8x128xf32>
    %314 = arith.addf %311, %313 : vector<8x128xf32>
    %315 = vector.broadcast %66 : f32 to vector<8x128xf32>
    %316 = arith.mulf %315, %195 : vector<8x128xf32>
    %317 = arith.addf %314, %316 : vector<8x128xf32>
    %318 = vector.broadcast %67 : f32 to vector<8x128xf32>
    %319 = arith.mulf %318, %207 : vector<8x128xf32>
    %320 = arith.addf %317, %319 : vector<8x128xf32>
    %321 = vector.broadcast %68 : f32 to vector<8x128xf32>
    %322 = arith.mulf %321, %219 : vector<8x128xf32>
    %323 = arith.addf %320, %322 : vector<8x128xf32>
    %324 = vector.broadcast %69 : f32 to vector<8x128xf32>
    %325 = arith.mulf %324, %231 : vector<8x128xf32>
    %326 = arith.addf %323, %325 : vector<8x128xf32>
    %327 = vector.broadcast %92 : f32 to vector<8x128xf32>
    %328 = arith.addf %326, %327 : vector<8x128xf32>
    %cst_17 = arith.constant 0.000000e+00 : f32
    %329 = vector.broadcast %cst_17 : f32 to vector<8x128xf32>
    %330 = arith.maximumf %328, %329 : vector<8x128xf32>
    %331 = vector.broadcast %70 : f32 to vector<8x128xf32>
    %332 = arith.mulf %331, %123 : vector<8x128xf32>
    %333 = vector.broadcast %71 : f32 to vector<8x128xf32>
    %334 = arith.mulf %333, %135 : vector<8x128xf32>
    %335 = arith.addf %332, %334 : vector<8x128xf32>
    %336 = vector.broadcast %72 : f32 to vector<8x128xf32>
    %337 = arith.mulf %336, %147 : vector<8x128xf32>
    %338 = arith.addf %335, %337 : vector<8x128xf32>
    %339 = vector.broadcast %73 : f32 to vector<8x128xf32>
    %340 = arith.mulf %339, %159 : vector<8x128xf32>
    %341 = arith.addf %338, %340 : vector<8x128xf32>
    %342 = vector.broadcast %74 : f32 to vector<8x128xf32>
    %343 = arith.mulf %342, %171 : vector<8x128xf32>
    %344 = arith.addf %341, %343 : vector<8x128xf32>
    %345 = vector.broadcast %75 : f32 to vector<8x128xf32>
    %346 = arith.mulf %345, %183 : vector<8x128xf32>
    %347 = arith.addf %344, %346 : vector<8x128xf32>
    %348 = vector.broadcast %76 : f32 to vector<8x128xf32>
    %349 = arith.mulf %348, %195 : vector<8x128xf32>
    %350 = arith.addf %347, %349 : vector<8x128xf32>
    %351 = vector.broadcast %77 : f32 to vector<8x128xf32>
    %352 = arith.mulf %351, %207 : vector<8x128xf32>
    %353 = arith.addf %350, %352 : vector<8x128xf32>
    %354 = vector.broadcast %78 : f32 to vector<8x128xf32>
    %355 = arith.mulf %354, %219 : vector<8x128xf32>
    %356 = arith.addf %353, %355 : vector<8x128xf32>
    %357 = vector.broadcast %79 : f32 to vector<8x128xf32>
    %358 = arith.mulf %357, %231 : vector<8x128xf32>
    %359 = arith.addf %356, %358 : vector<8x128xf32>
    %360 = vector.broadcast %93 : f32 to vector<8x128xf32>
    %361 = arith.addf %359, %360 : vector<8x128xf32>
    %cst_18 = arith.constant 0.000000e+00 : f32
    %362 = vector.broadcast %cst_18 : f32 to vector<8x128xf32>
    %363 = arith.maximumf %361, %362 : vector<8x128xf32>
    %364 = vector.broadcast %80 : f32 to vector<8x128xf32>
    %365 = arith.mulf %364, %123 : vector<8x128xf32>
    %366 = vector.broadcast %81 : f32 to vector<8x128xf32>
    %367 = arith.mulf %366, %135 : vector<8x128xf32>
    %368 = arith.addf %365, %367 : vector<8x128xf32>
    %369 = vector.broadcast %82 : f32 to vector<8x128xf32>
    %370 = arith.mulf %369, %147 : vector<8x128xf32>
    %371 = arith.addf %368, %370 : vector<8x128xf32>
    %372 = vector.broadcast %83 : f32 to vector<8x128xf32>
    %373 = arith.mulf %372, %159 : vector<8x128xf32>
    %374 = arith.addf %371, %373 : vector<8x128xf32>
    %375 = vector.broadcast %84 : f32 to vector<8x128xf32>
    %376 = arith.mulf %375, %171 : vector<8x128xf32>
    %377 = arith.addf %374, %376 : vector<8x128xf32>
    %378 = vector.broadcast %85 : f32 to vector<8x128xf32>
    %379 = arith.mulf %378, %183 : vector<8x128xf32>
    %380 = arith.addf %377, %379 : vector<8x128xf32>
    %381 = vector.broadcast %86 : f32 to vector<8x128xf32>
    %382 = arith.mulf %381, %195 : vector<8x128xf32>
    %383 = arith.addf %380, %382 : vector<8x128xf32>
    %384 = vector.broadcast %87 : f32 to vector<8x128xf32>
    %385 = arith.mulf %384, %207 : vector<8x128xf32>
    %386 = arith.addf %383, %385 : vector<8x128xf32>
    %387 = vector.broadcast %88 : f32 to vector<8x128xf32>
    %388 = arith.mulf %387, %219 : vector<8x128xf32>
    %389 = arith.addf %386, %388 : vector<8x128xf32>
    %390 = vector.broadcast %89 : f32 to vector<8x128xf32>
    %391 = arith.mulf %390, %231 : vector<8x128xf32>
    %392 = arith.addf %389, %391 : vector<8x128xf32>
    %393 = vector.broadcast %94 : f32 to vector<8x128xf32>
    %394 = arith.addf %392, %393 : vector<8x128xf32>
    %cst_19 = arith.constant 0.000000e+00 : f32
    %395 = vector.broadcast %cst_19 : f32 to vector<8x128xf32>
    %396 = arith.maximumf %394, %395 : vector<8x128xf32>
    %397 = vector.broadcast %95 : f32 to vector<8x128xf32>
    %398 = arith.mulf %397, %264 : vector<8x128xf32>
    %399 = vector.broadcast %96 : f32 to vector<8x128xf32>
    %400 = arith.mulf %399, %297 : vector<8x128xf32>
    %401 = arith.addf %398, %400 : vector<8x128xf32>
    %402 = vector.broadcast %97 : f32 to vector<8x128xf32>
    %403 = arith.mulf %402, %330 : vector<8x128xf32>
    %404 = arith.addf %401, %403 : vector<8x128xf32>
    %405 = vector.broadcast %98 : f32 to vector<8x128xf32>
    %406 = arith.mulf %405, %363 : vector<8x128xf32>
    %407 = arith.addf %404, %406 : vector<8x128xf32>
    %408 = vector.broadcast %99 : f32 to vector<8x128xf32>
    %409 = arith.mulf %408, %396 : vector<8x128xf32>
    %410 = arith.addf %407, %409 : vector<8x128xf32>
    %411 = vector.broadcast %100 : f32 to vector<8x128xf32>
    %412 = arith.addf %410, %411 : vector<8x128xf32>
    %cst_20 = arith.constant 5.000000e-01 : f32
    %413 = vector.broadcast %cst_20 : f32 to vector<8x128xf32>
    %414 = arith.mulf %413, %412 : vector<8x128xf32>
    %415 = math.tanh %414 : vector<8x128xf32>
    %cst_21 = arith.constant 5.000000e-01 : f32
    %416 = vector.broadcast %cst_21 : f32 to vector<8x128xf32>
    %417 = arith.mulf %416, %415 : vector<8x128xf32>
    %cst_22 = arith.constant 5.000000e-01 : f32
    %418 = vector.broadcast %cst_22 : f32 to vector<8x128xf32>
    %419 = arith.addf %417, %418 : vector<8x128xf32>
    %420 = arith.index_cast %102 : i32 to index
    %c0_23 = arith.constant 0 : index
    %421 = vector.load %arg3[%420, %c0_23] : memref<8x128xf32, #tpu.memory_space<vmem>>, vector<8x128xf32>
    tpu.vector_store %arg3[%420, %c0_23], %419 {strides = array<i32>} : memref<8x128xf32, #tpu.memory_space<vmem>>, vector<8x128xf32>,
    %c1_i32 = arith.constant 1 : i32
    return
  }
  func.func @transform_0(%arg0: i32) -> i32 {
    %c0_i32 = arith.constant 0 : i32
    %c0_i32_0 = arith.constant 0 : i32
    return %c0_i32 : i32
  }
  func.func @transform_1(%arg0: i32) -> (i32, i32, i32) {
    %c0_i32 = arith.constant 0 : i32
    %c0_i32_0 = arith.constant 0 : i32
    %c0_i32_1 = arith.constant 0 : i32
    return %c0_i32, %arg0, %c0_i32_0 : i32, i32, i32
  }
  func.func @transform_2(%arg0: i32) -> (i32, i32) {
    %c0_i32 = arith.constant 0 : i32
    %c0_i32_0 = arith.constant 0 : i32
    return %arg0, %c0_i32 : i32, i32
  }
}

</mosaic_0001>

<llo_original>
// kernel: tpu_custom_call.1
$region0: #{tpu_custom_call.1}
  #allocation0 [shape = 'u32[]', space=smem, size = 0x4, offset = 0x4, fixed_abs, tag = 'smem constant byte address 0x4 - core index']
  #allocation1 [shape = 'u32[72,128]{1,0:T(1,128)}', space=vmem, size = 0x9000, scoped, tag = 'internal scratch']
  %s0 = inlined_call_operand.hbm [shape: f32[101], index: 0, kind: input, shape index: {}]
  %s1 = inlined_call_operand.hbm [shape: f32[3,8,128], index: 1, kind: input, shape index: {}]
  %s2 = inlined_call_operand.hbm [shape: f32[8,128], index: 2, kind: output, shape index: {}]
  %s3 = sld [smem:[#allocation0]]
  $region26: #{tpu_custom_call.1} parent=0
    _
  %s5 = ssub.s32 1, %s3
  %s6 = scalar_select 0, %s5, %s3
  $region1: #{tpu_custom_call.1} parent=0
    #allocation2 [shape = 'u8[512]{0}', space=smem, size = 0x200, scoped, tag = 'input window, operand 0, single buffered']
    #allocation3 [shape = 's32[1]{0}', space=sflag, size = 0x4, scoped, tag = 'scoped memory for tpu_custom_call.1']
    #allocation4 [shape = 's32[1]{0}', space=sflag, size = 0x4, scoped, tag = 'scoped memory for tpu_custom_call.1']
    #allocation5 [shape = 's32[1]{0}', space=sflag, size = 0x4, scoped, tag = 'scoped memory for tpu_custom_call.1']
    #allocation6 [shape = 'u8[12288]{0}', space=vmem, size = 0x3000, scoped, tag = 'input window, operand 1, single buffered']
    #allocation7 [shape = 'u8[4096]{0}', space=vmem, size = 0x1000, scoped, tag = 'output window, operand 0, single buffered']
    %7 = vsyncpa [#allocation5], 0
    %8 = vsyncpa [#allocation3], 0
    %9 = vsyncpa [#allocation4], 0
    // Predicated region
    $region2: #{tpu_custom_call.1} parent=1 // pred_check
      _
    $region3: #{tpu_custom_call.1} parent=1 // pred_check_branch
      %11 = sbr.rel (0) target = $region5
    $region4: #{tpu_custom_call.1} parent=1 // pred_region
      %13 = vsyncadd [#allocation5], 0
      %s15 = sshll.u32 %s0, 4
      %s16 = int_to_ptr.hbm [resolvable:$true] %s15
      %18 = dma.hbm_to_smem %s16, 16, [#allocation2], [#allocation5]
    $region5: #{tpu_custom_call.1} parent=1 // pred_fallthru
      _
    // Predicated region
    $region6: #{tpu_custom_call.1} parent=1 // pred_check
      _
    $region7: #{tpu_custom_call.1} parent=1 // pred_check_branch
      %20 = sbr.rel (0) target = $region9
    $region8: #{tpu_custom_call.1} parent=1 // pred_region
      %22 = vsyncadd [#allocation3], 0
      %s23 = sshll.u32 %s1, 4
      %s24 = int_to_ptr.hbm [resolvable:$true] %s23
      %s25 = sshll.u32 [#allocation6], 4
      %s26 = int_to_ptr.vmem [resolvable:$true] %s25
      %31 = dma.hbm_to_vmem [thread:$0]  %s24, 384, %s26, [#allocation3], 128, 128, 8
    $region9: #{tpu_custom_call.1} parent=1 // pred_fallthru
      _
    // Predicated region
    $region10: #{tpu_custom_call.1} parent=1 // pred_check
      _
    $region11: #{tpu_custom_call.1} parent=1 // pred_check_branch
      %33 = sbr.rel (0) target = $region13
    $region12: #{tpu_custom_call.1} parent=1 // pred_region
      %35 = dma.done [#allocation5], 16
    $region13: #{tpu_custom_call.1} parent=1 // pred_fallthru
      _
    // Predicated region
    $region14: #{tpu_custom_call.1} parent=1 // pred_check
      _
    $region15: #{tpu_custom_call.1} parent=1 // pred_check_branch
      %37 = sbr.rel (0) target = $region17
    $region16: #{tpu_custom_call.1} parent=1 // pred_region
      %39 = dma.done [#allocation3], 384
    $region17: #{tpu_custom_call.1} parent=1 // pred_fallthru
      _
    %40 = sfence
    %s41 = sld [smem:[#allocation2]]
    %s42 = sld [smem:[#allocation2 + $0x1]]
    %s43 = sld [smem:[#allocation2 + $0x2]]
    %s44 = sld [smem:[#allocation2 + $0x3]]
    %s45 = sld [smem:[#allocation2 + $0x4]]
    %s46 = sld [smem:[#allocation2 + $0x5]]
    %s47 = sld [smem:[#allocation2 + $0x6]]
    %s48 = sld [smem:[#allocation2 + $0x7]]
    %s49 = sld [smem:[#allocation2 + $0x8]]
    %s50 = sld [smem:[#allocation2 + $0x9]]
    %s51 = sld [smem:[#allocation2 + $0xa]]
    %s52 = sld [smem:[#allocation2 + $0xb]]
    %s53 = sld [smem:[#allocation2 + $0xc]]
    %s54 = sld [smem:[#allocation2 + $0xd]]
    %s55 = sld [smem:[#allocation2 + $0xe]]
    %s56 = sld [smem:[#allocation2 + $0xf]]
    %s57 = sld [smem:[#allocation2 + $0x10]]
    %s58 = sld [smem:[#allocation2 + $0x11]]
    %s59 = sld [smem:[#allocation2 + $0x12]]
    %s60 = sld [smem:[#allocation2 + $0x13]]
    %s61 = sld [smem:[#allocation2 + $0x14]]
    %s62 = sld [smem:[#allocation2 + $0x15]]
    %s63 = sld [smem:[#allocation2 + $0x16]]
    %s64 = sld [smem:[#allocation2 + $0x17]]
    %s65 = sld [smem:[#allocation2 + $0x18]]
    %s66 = sld [smem:[#allocation2 + $0x19]]
    %s67 = sld [smem:[#allocation2 + $0x1a]]
    %s68 = sld [smem:[#allocation2 + $0x1b]]
    %s69 = sld [smem:[#allocation2 + $0x1c]]
    %s70 = sld [smem:[#allocation2 + $0x1d]]
    %s71 = sld [smem:[#allocation2 + $0x1e]]
    %s72 = sld [smem:[#allocation2 + $0x1f]]
    %s73 = sld [smem:[#allocation2 + $0x20]]
    %s74 = sld [smem:[#allocation2 + $0x21]]
    %s75 = sld [smem:[#allocation2 + $0x22]]
    %s76 = sld [smem:[#allocation2 + $0x23]]
    %s77 = sld [smem:[#allocation2 + $0x24]]
    %s78 = sld [smem:[#allocation2 + $0x25]]
    %s79 = sld [smem:[#allocation2 + $0x26]]
    %s80 = sld [smem:[#allocation2 + $0x27]]
    %s81 = sld [smem:[#allocation2 + $0x28]]
    %s82 = sld [smem:[#allocation2 + $0x29]]
    %s83 = sld [smem:[#allocation2 + $0x2a]]
    %s84 = sld [smem:[#allocation2 + $0x2b]]
    %s85 = sld [smem:[#allocation2 + $0x2c]]
    %s86 = sld [smem:[#allocation2 + $0x2d]]
    %s87 = sld [smem:[#allocation2 + $0x2e]]
    %s88 = sld [smem:[#allocation2 + $0x2f]]
    %s89 = sld [smem:[#allocation2 + $0x30]]
    %s90 = sld [smem:[#allocation2 + $0x31]]
    %s91 = sld [smem:[#allocation2 + $0x32]]
    %s92 = sld [smem:[#allocation2 + $0x33]]
    %s93 = sld [smem:[#allocation2 + $0x34]]
    %s94 = sld [smem:[#allocation2 + $0x35]]
    %s95 = sld [smem:[#allocation2 + $0x36]]
    %s96 = sld [smem:[#allocation2 + $0x37]]
    %s97 = sld [smem:[#allocation2 + $0x38]]
    %s98 = sld [smem:[#allocation2 + $0x39]]
    %s99 = sld [smem:[#allocation2 + $0x3a]]
    %s100 = sld [smem:[#allocation2 + $0x3b]]
    %s101 = sld [smem:[#allocation2 + $0x3c]]
    %s102 = sld [smem:[#allocation2 + $0x3d]]
    %s103 = sld [smem:[#allocation2 + $0x3e]]
    %s104 = sld [smem:[#allocation2 + $0x3f]]
    %s105 = sld [smem:[#allocation2 + $0x40]]
    %s106 = sld [smem:[#allocation2 + $0x41]]
    %s107 = sld [smem:[#allocation2 + $0x42]]
    %s108 = sld [smem:[#allocation2 + $0x43]]
    %s109 = sld [smem:[#allocation2 + $0x44]]
    %s110 = sld [smem:[#allocation2 + $0x45]]
    %s111 = sld [smem:[#allocation2 + $0x46]]
    %s112 = sld [smem:[#allocation2 + $0x47]]
    %s113 = sld [smem:[#allocation2 + $0x48]]
    %s114 = sld [smem:[#allocation2 + $0x49]]
    %s115 = sld [smem:[#allocation2 + $0x4a]]
    %s116 = sld [smem:[#allocation2 + $0x4b]]
    %s117 = sld [smem:[#allocation2 + $0x4c]]
    %s118 = sld [smem:[#allocation2 + $0x4d]]
    %s119 = sld [smem:[#allocation2 + $0x4e]]
    %s120 = sld [smem:[#allocation2 + $0x4f]]
    %s121 = sld [smem:[#allocation2 + $0x50]]
    %s122 = sld [smem:[#allocation2 + $0x51]]
    %s123 = sld [smem:[#allocation2 + $0x52]]
    %s124 = sld [smem:[#allocation2 + $0x53]]
    %s125 = sld [smem:[#allocation2 + $0x54]]
    %s126 = sld [smem:[#allocation2 + $0x55]]
    %s127 = sld [smem:[#allocation2 + $0x56]]
    %s128 = sld [smem:[#allocation2 + $0x57]]
    %s129 = sld [smem:[#allocation2 + $0x58]]
    %s130 = sld [smem:[#allocation2 + $0x59]]
    %s131 = sld [smem:[#allocation2 + $0x5a]]
    %s132 = sld [smem:[#allocation2 + $0x5b]]
    %s133 = sld [smem:[#allocation2 + $0x5c]]
    %s134 = sld [smem:[#allocation2 + $0x5d]]
    %s135 = sld [smem:[#allocation2 + $0x5e]]
    %s136 = sld [smem:[#allocation2 + $0x5f]]
    %s137 = sld [smem:[#allocation2 + $0x60]]
    %s138 = sld [smem:[#allocation2 + $0x61]]
    %s139 = sld [smem:[#allocation2 + $0x62]]
    %s140 = sld [smem:[#allocation2 + $0x63]]
    %s141 = sld [smem:[#allocation2 + $0x64]]
    %v142 = vld [vmem:[#allocation6] sm:$0xff]
    %s143 = sadd.s32 0, 8
    %s144 = scalar_lea.vmem [#allocation6], %s143
    %v145 = vld [vmem:[%s144] sm:$0xff]
    %s146 = sadd.s32 0, 16
    %s147 = scalar_lea.vmem [#allocation6], %s146
    %v148 = vld [vmem:[%s147] sm:$0xff]
    %v149 = vstv %s41
    %v150 = vmul.f32 %v149, %v142
    %v151 = vstv %s42
    %v152 = vmul.f32 %v151, %v145
    %v153 = vadd.f32 %v150, %v152
    %v154 = vstv %s43
    %v155 = vmul.f32 %v154, %v148
    %v156 = vadd.f32 %v153, %v155
    %v157 = vstv %s71
    %v158 = vadd.f32 %v156, %v157
    %v159 = vmax.f32 %v158, 0.0
    %v160 = vstv %s44
    %v161 = vmul.f32 %v160, %v142
    %v162 = vstv %s45
    %v163 = vmul.f32 %v162, %v145
    %v164 = vadd.f32 %v161, %v163
    %v165 = vstv %s46
    %v166 = vmul.f32 %v165, %v148
    %v167 = vadd.f32 %v164, %v166
    %v168 = vstv %s72
    %v169 = vadd.f32 %v167, %v168
    %v170 = vmax.f32 %v169, 0.0
    %v171 = vstv %s47
    %v172 = vmul.f32 %v171, %v142
    %v173 = vstv %s48
    %v174 = vmul.f32 %v173, %v145
    %v175 = vadd.f32 %v172, %v174
    %v176 = vstv %s49
    %v177 = vmul.f32 %v176, %v148
    %v178 = vadd.f32 %v175, %v177
    %v179 = vstv %s73
    %v180 = vadd.f32 %v178, %v179
    %v181 = vmax.f32 %v180, 0.0
    %v182 = vstv %s50
    %v183 = vmul.f32 %v182, %v142
    %v184 = vstv %s51
    %v185 = vmul.f32 %v184, %v145
    %v186 = vadd.f32 %v183, %v185
    %v187 = vstv %s52
    %v188 = vmul.f32 %v187, %v148
    %v189 = vadd.f32 %v186, %v188
    %v190 = vstv %s74
    %v191 = vadd.f32 %v189, %v190
    %v192 = vmax.f32 %v191, 0.0
    %v193 = vstv %s53
    %v194 = vmul.f32 %v193, %v142
    %v195 = vstv %s54
    %v196 = vmul.f32 %v195, %v145
    %v197 = vadd.f32 %v194, %v196
    %v198 = vstv %s55
    %v199 = vmul.f32 %v198, %v148
    %v200 = vadd.f32 %v197, %v199
    %v201 = vstv %s75
    %v202 = vadd.f32 %v200, %v201
    %v203 = vmax.f32 %v202, 0.0
    %v204 = vstv %s56
    %v205 = vmul.f32 %v204, %v142
    %v206 = vstv %s57
    %v207 = vmul.f32 %v206, %v145
    %v208 = vadd.f32 %v205, %v207
    %v209 = vstv %s58
    %v210 = vmul.f32 %v209, %v148
    %v211 = vadd.f32 %v208, %v210
    %v212 = vstv %s76
    %v213 = vadd.f32 %v211, %v212
    %v214 = vmax.f32 %v213, 0.0
    %v215 = vstv %s59
    %v216 = vmul.f32 %v215, %v142
    %v217 = vstv %s60
    %v218 = vmul.f32 %v217, %v145
    %v219 = vadd.f32 %v216, %v218
    %v220 = vstv %s61
    %v221 = vmul.f32 %v220, %v148
    %v222 = vadd.f32 %v219, %v221
    %v223 = vstv %s77
    %v224 = vadd.f32 %v222, %v223
    %v225 = vmax.f32 %v224, 0.0
    %v226 = vstv %s62
    %v227 = vmul.f32 %v226, %v142
    %v228 = vstv %s63
    %v229 = vmul.f32 %v228, %v145
    %v230 = vadd.f32 %v227, %v229
    %v231 = vstv %s64
    %v232 = vmul.f32 %v231, %v148
    %v233 = vadd.f32 %v230, %v232
    %v234 = vstv %s78
    %v235 = vadd.f32 %v233, %v234
    %v236 = vmax.f32 %v235, 0.0
    %v237 = vstv %s65
    %v238 = vmul.f32 %v237, %v142
    %v239 = vstv %s66
    %v240 = vmul.f32 %v239, %v145
    %v241 = vadd.f32 %v238, %v240
    %v242 = vstv %s67
    %v243 = vmul.f32 %v242, %v148
    %v244 = vadd.f32 %v241, %v243
    %v245 = vstv %s79
    %v246 = vadd.f32 %v244, %v245
    %v247 = vmax.f32 %v246, 0.0
    %v248 = vstv %s68
    %v249 = vmul.f32 %v248, %v142
    %v250 = vstv %s69
    %v251 = vmul.f32 %v250, %v145
    %v252 = vadd.f32 %v249, %v251
    %v253 = vstv %s70
    %v254 = vmul.f32 %v253, %v148
    %v255 = vadd.f32 %v252, %v254
    %v256 = vstv %s80
    %v257 = vadd.f32 %v255, %v256
    %v258 = vmax.f32 %v257, 0.0
    %v259 = vstv %s81
    %v260 = vmul.f32 %v259, %v159
    %v261 = vstv %s82
    %v262 = vmul.f32 %v261, %v170
    %v263 = vadd.f32 %v260, %v262
    %v264 = vstv %s83
    %v265 = vmul.f32 %v264, %v181
    %v266 = vadd.f32 %v263, %v265
    %v267 = vstv %s84
    %v268 = vmul.f32 %v267, %v192
    %v269 = vadd.f32 %v266, %v268
    %v270 = vstv %s85
    %v271 = vmul.f32 %v270, %v203
    %v272 = vadd.f32 %v269, %v271
    %v273 = vstv %s86
    %v274 = vmul.f32 %v273, %v214
    %v275 = vadd.f32 %v272, %v274
    %v276 = vstv %s87
    %v277 = vmul.f32 %v276, %v225
    %v278 = vadd.f32 %v275, %v277
    %v279 = vstv %s88
    %v280 = vmul.f32 %v279, %v236
    %v281 = vadd.f32 %v278, %v280
    %v282 = vstv %s89
    %v283 = vmul.f32 %v282, %v247
    %v284 = vadd.f32 %v281, %v283
    %v285 = vstv %s90
    %v286 = vmul.f32 %v285, %v258
    %v287 = vadd.f32 %v284, %v286
    %v288 = vstv %s131
    %v289 = vadd.f32 %v287, %v288
    %v290 = vmax.f32 %v289, 0.0
    %v291 = vstv %s91
    %v292 = vmul.f32 %v291, %v159
    %v293 = vstv %s92
    %v294 = vmul.f32 %v293, %v170
    %v295 = vadd.f32 %v292, %v294
    %v296 = vstv %s93
    %v297 = vmul.f32 %v296, %v181
    %v298 = vadd.f32 %v295, %v297
    %v299 = vstv %s94
    %v300 = vmul.f32 %v299, %v192
    %v301 = vadd.f32 %v298, %v300
    %v302 = vstv %s95
    %v303 = vmul.f32 %v302, %v203
    %v304 = vadd.f32 %v301, %v303
    %v305 = vstv %s96
    %v306 = vmul.f32 %v305, %v214
    %v307 = vadd.f32 %v304, %v306
    %v308 = vstv %s97
    %v309 = vmul.f32 %v308, %v225
    %v310 = vadd.f32 %v307, %v309
    %v311 = vstv %s98
    %v312 = vmul.f32 %v311, %v236
    %v313 = vadd.f32 %v310, %v312
    %v314 = vstv %s99
    %v315 = vmul.f32 %v314, %v247
    %v316 = vadd.f32 %v313, %v315
    %v317 = vstv %s100
    %v318 = vmul.f32 %v317, %v258
    %v319 = vadd.f32 %v316, %v318
    %v320 = vstv %s132
    %v321 = vadd.f32 %v319, %v320
    %v322 = vmax.f32 %v321, 0.0
    %v323 = vstv %s101
    %v324 = vmul.f32 %v323, %v159
    %v325 = vstv %s102
    %v326 = vmul.f32 %v325, %v170
    %v327 = vadd.f32 %v324, %v326
    %v328 = vstv %s103
    %v329 = vmul.f32 %v328, %v181
    %v330 = vadd.f32 %v327, %v329
    %v331 = vstv %s104
    %v332 = vmul.f32 %v331, %v192
    %v333 = vadd.f32 %v330, %v332
    %v334 = vstv %s105
    %v335 = vmul.f32 %v334, %v203
    %v336 = vadd.f32 %v333, %v335
    %v337 = vstv %s106
    %v338 = vmul.f32 %v337, %v214
    %v339 = vadd.f32 %v336, %v338
    %v340 = vstv %s107
    %v341 = vmul.f32 %v340, %v225
    %v342 = vadd.f32 %v339, %v341
    %v343 = vstv %s108
    %v344 = vmul.f32 %v343, %v236
    %v345 = vadd.f32 %v342, %v344
    %v346 = vstv %s109
    %v347 = vmul.f32 %v346, %v247
    %v348 = vadd.f32 %v345, %v347
    %v349 = vstv %s110
    %v350 = vmul.f32 %v349, %v258
    %v351 = vadd.f32 %v348, %v350
    %v352 = vstv %s133
    %v353 = vadd.f32 %v351, %v352
    %v354 = vmax.f32 %v353, 0.0
    %v355 = vstv %s111
    %v356 = vmul.f32 %v355, %v159
    %v357 = vstv %s112
    %v358 = vmul.f32 %v357, %v170
    %v359 = vadd.f32 %v356, %v358
    %v360 = vstv %s113
    %v361 = vmul.f32 %v360, %v181
    %v362 = vadd.f32 %v359, %v361
    %v363 = vstv %s114
    %v364 = vmul.f32 %v363, %v192
    %v365 = vadd.f32 %v362, %v364
    %v366 = vstv %s115
    %v367 = vmul.f32 %v366, %v203
    %v368 = vadd.f32 %v365, %v367
    %v369 = vstv %s116
    %v370 = vmul.f32 %v369, %v214
    %v371 = vadd.f32 %v368, %v370
    %v372 = vstv %s117
    %v373 = vmul.f32 %v372, %v225
    %v374 = vadd.f32 %v371, %v373
    %v375 = vstv %s118
    %v376 = vmul.f32 %v375, %v236
    %v377 = vadd.f32 %v374, %v376
    %v378 = vstv %s119
    %v379 = vmul.f32 %v378, %v247
    %v380 = vadd.f32 %v377, %v379
    %v381 = vstv %s120
    %v382 = vmul.f32 %v381, %v258
    %v383 = vadd.f32 %v380, %v382
    %v384 = vstv %s134
    %v385 = vadd.f32 %v383, %v384
    %v386 = vmax.f32 %v385, 0.0
    %v387 = vstv %s121
    %v388 = vmul.f32 %v387, %v159
    %v389 = vstv %s122
    %v390 = vmul.f32 %v389, %v170
    %v391 = vadd.f32 %v388, %v390
    %v392 = vstv %s123
    %v393 = vmul.f32 %v392, %v181
    %v394 = vadd.f32 %v391, %v393
    %v395 = vstv %s124
    %v396 = vmul.f32 %v395, %v192
    %v397 = vadd.f32 %v394, %v396
    %v398 = vstv %s125
    %v399 = vmul.f32 %v398, %v203
    %v400 = vadd.f32 %v397, %v399
    %v401 = vstv %s126
    %v402 = vmul.f32 %v401, %v214
    %v403 = vadd.f32 %v400, %v402
    %v404 = vstv %s127
    %v405 = vmul.f32 %v404, %v225
    %v406 = vadd.f32 %v403, %v405
    %v407 = vstv %s128
    %v408 = vmul.f32 %v407, %v236
    %v409 = vadd.f32 %v406, %v408
    %v410 = vstv %s129
    %v411 = vmul.f32 %v410, %v247
    %v412 = vadd.f32 %v409, %v411
    %v413 = vstv %s130
    %v414 = vmul.f32 %v413, %v258
    %v415 = vadd.f32 %v412, %v414
    %v416 = vstv %s135
    %v417 = vadd.f32 %v415, %v416
    %v418 = vmax.f32 %v417, 0.0
    %v419 = vstv %s136
    %v420 = vmul.f32 %v419, %v290
    %v421 = vstv %s137
    %v422 = vmul.f32 %v421, %v322
    %v423 = vadd.f32 %v420, %v422
    %v424 = vstv %s138
    %v425 = vmul.f32 %v424, %v354
    %v426 = vadd.f32 %v423, %v425
    %v427 = vstv %s139
    %v428 = vmul.f32 %v427, %v386
    %v429 = vadd.f32 %v426, %v428
    %v430 = vstv %s140
    %v431 = vmul.f32 %v430, %v418
    %v432 = vadd.f32 %v429, %v431
    %v433 = vstv %s141
    %v434 = vadd.f32 %v432, %v433
    %v435 = vmul.f32 %v434, 0.5
    %v436 = vtanh.pop %v435
    %v437 = vmul.f32 %v436, 0.5
    %v438 = vadd.f32 %v437, 0.5
    %439 = vst [vmem:[#allocation7] sm:$0xff] %v438
    // Predicated region
    $region18: #{tpu_custom_call.1} parent=1 // pred_check
      _
    $region19: #{tpu_custom_call.1} parent=1 // pred_check_branch
      %441 = sbr.rel (0) target = $region21
    $region20: #{tpu_custom_call.1} parent=1 // pred_region
      %443 = vsyncadd [#allocation4], 0
      %s445 = sshll.u32 [#allocation7], 4
      %s446 = int_to_ptr.vmem [resolvable:$true] %s445
      %s447 = sshll.u32 %s2, 4
      %s448 = int_to_ptr.hbm [resolvable:$true] %s447
      %450 = dma.vmem_to_hbm [thread:$0]  %s446, 128, %s448, [#allocation4]
    $region21: #{tpu_custom_call.1} parent=1 // pred_fallthru
      _
    // Predicated region
    $region22: #{tpu_custom_call.1} parent=1 // pred_check
      _
    $region23: #{tpu_custom_call.1} parent=1 // pred_check_branch
      %452 = sbr.rel (0) target = $region25
    $region24: #{tpu_custom_call.1} parent=1 // pred_region
      %454 = dma.done [#allocation4], 128
    $region25: #{tpu_custom_call.1} parent=1 // pred_fallthru
      _
    %455 = vsyncpa [#allocation3], 1
    %456 = vsyncpa [#allocation4], 1
    %457 = vsyncpa [#allocation5], 1

</llo_original>
